<compile_context>
chip_gen: v6e
topology: v6e:2x2x1
jax: 0.10.0
libtpu: 0.0.40
codegen_flags: <defaults>
</compile_context>

<pallas_src>
import functools

import jax
import jax.numpy as jnp
from jax.experimental import pallas as pl
from jax.experimental.pallas import tpu as pltpu


def _distill_loss_kernel(x_ref, c_ref, loss_ref,
                         xn_ref, m_ref, l_ref, t_ref,
                         *, n_valid, tk):
    """One (b_tile, key_tile) grid step.

    x_ref:    (TB, Dp) f32   query rows (resident across the key axis)
    c_ref:    (TK, Dp) f32   candidate rows for this key tile
    loss_ref: (TB, 1)  f32   per-row loss output (written at the last key tile)
    xn_ref:   (TB, Dp) f32   scratch: normalized queries (computed once at k==0)
    m_ref:    (TB, 1)  f32   scratch: running row max
    l_ref:    (TB, 1)  f32   scratch: running sum of exp
    t_ref:    (TB, 1)  f32   scratch: target logit (global column 1)
    """
    k = pl.program_id(1)
    eps = jnp.float32(1e-12)  # F.normalize default eps

    @pl.when(k == 0)
    def _init():
        x = x_ref[...]
        # rsqrt + multiply (EUP) instead of sqrt + divide (VALU).
        inv = jax.lax.rsqrt(
            jnp.maximum(jnp.sum(x * x, axis=-1, keepdims=True), eps * eps))
        xn_ref[...] = x * inv
        m_ref[...] = jnp.full_like(m_ref, -jnp.inf)
        l_ref[...] = jnp.zeros_like(l_ref)
        t_ref[...] = jnp.zeros_like(t_ref)

    c = c_ref[...]
    cinv = jax.lax.rsqrt(
        jnp.maximum(jnp.sum(c * c, axis=-1, keepdims=True), eps * eps))
    cn = c * cinv

    # (TB, TK) cosine logits; contract both operands on their last (lane) dim
    # so no transposed (Dp, TK) copy of cn is materialized before the MXU.
    logits = jax.lax.dot_general(
        xn_ref[...], cn,
        dimension_numbers=(((1,), (1,)), ((), ())),
        preferred_element_type=jnp.float32)

    if n_valid % tk != 0:
        # Last key tile is padded with zero rows -> mask them out of the
        # logsumexp.  (Static Python branch; no cost when no padding exists.)
        col = jax.lax.broadcasted_iota(jnp.int32, logits.shape, 1) + k * tk
        logits = jnp.where(col < n_valid, logits, -jnp.inf)

    # Target logit: labels == 1 for every row, i.e. global candidate column 1,
    # which always lives in key tile 0 (tk >= 2).  Static lane slice, no gather.
    @pl.when(k == 0)
    def _grab_target():
        t_ref[...] = logits[:, 1:2]

    # Online max / logsumexp accumulation across key tiles.
    m_prev = m_ref[...]
    m_new = jnp.maximum(m_prev, jnp.max(logits, axis=-1, keepdims=True))
    l_ref[...] = (jnp.exp(m_prev - m_new) * l_ref[...]
                  + jnp.sum(jnp.exp(logits - m_new), axis=-1, keepdims=True))
    m_ref[...] = m_new

    @pl.when(k == pl.num_programs(1) - 1)
    def _finish():
        lse = m_ref[...] + jnp.log(l_ref[...])
        loss_ref[...] = lse - t_ref[...]


def distillation_loss(x_lm, candidates_lm_z, *, max_tb=256, max_tk=512):
    """JAX/Pallas equivalent of DistillationLoss.forward.

    x_lm:             (B, D)
    candidates_lm_z:  (B, C, D)
    returns scalar f32 loss.

    max_tb / max_tk are the query-row / candidate-row tile sizes used once the
    problem is large enough to need tiling (both must be multiples of 8).
    For tiny problems (like the demo below) the whole problem is one block; the
    ~0.5 us fixed pallas_call overhead then dominates, so batching many losses
    per call (or plain XLA) is preferable in production.
    """
    B, D = x_lm.shape
    Bc, C, Dc = candidates_lm_z.shape
    assert B == Bc and D == Dc
    N = B * C
    assert N >= 2, "labels==1 requires at least 2 candidate rows"

    x = x_lm.astype(jnp.float32)                        # (B, D) -- NOT expanded
    cand = candidates_lm_z.reshape(N, D).astype(jnp.float32)

    # Pad D to a lane multiple (zeros change neither norms nor dot products).
    # No-op for realistic D (multiples of 128).
    if D % 128 != 0:
        d_pad = pl.cdiv(D, 128) * 128
        x = jnp.pad(x, ((0, 0), (0, d_pad - D)))
        cand = jnp.pad(cand, ((0, 0), (0, d_pad - D)))
    else:
        d_pad = D

    # Query-row tiling (parallel axis).  Padded query rows produce garbage
    # per-row losses that are sliced off before the mean.
    if B <= max_tb:
        tb, b_pad = B, B
    else:
        tb = max_tb
        b_pad = pl.cdiv(B, tb) * tb
        x = jnp.pad(x, ((0, b_pad - B), (0, 0)))
    # Candidate-row tiling (reduction axis).  Padded key rows are masked to
    # -inf inside the kernel.
    if N <= max_tk:
        tk, n_pad = N, N
    else:
        tk = max_tk
        n_pad = pl.cdiv(N, tk) * tk
        cand = jnp.pad(cand, ((0, n_pad - N), (0, 0)))

    num_b = b_pad // tb
    num_k = n_pad // tk

    kernel = functools.partial(_distill_loss_kernel, n_valid=N, tk=tk)

    row_loss = pl.pallas_call(
        kernel,
        out_shape=jax.ShapeDtypeStruct((b_pad, 1), jnp.float32),
        grid_spec=pltpu.PrefetchScalarGridSpec(
            num_scalar_prefetch=0,
            grid=(num_b, num_k),
            in_specs=[
                pl.BlockSpec((tb, d_pad), lambda b, k: (b, 0)),   # queries
                pl.BlockSpec((tk, d_pad), lambda b, k: (k, 0)),   # candidates
            ],
            out_specs=pl.BlockSpec((tb, 1), lambda b, k: (b, 0)),
            scratch_shapes=[
                pltpu.VMEM((tb, d_pad), jnp.float32),   # normalized queries
                pltpu.VMEM((tb, 1), jnp.float32),       # running max
                pltpu.VMEM((tb, 1), jnp.float32),       # running sum of exp
                pltpu.VMEM((tb, 1), jnp.float32),       # target logit
            ],
        ),
        compiler_params=pltpu.CompilerParams(
            dimension_semantics=("parallel", "arbitrary"),
            vmem_limit_bytes=32 * 1024 * 1024,
        ),
        cost_estimate=pl.CostEstimate(
            flops=int(2 * b_pad * n_pad * d_pad + 4 * (b_pad + num_b * n_pad) * d_pad),
            transcendentals=int(b_pad * n_pad + b_pad + num_b * n_pad),
            bytes_accessed=int(4 * (b_pad * d_pad + num_b * n_pad * d_pad + b_pad)),
        ),
    )(x, cand)

    # Each of the C expanded copies of a query row has an identical loss, so
    # the mean over the N expanded rows equals the mean over the B query rows.
    return jnp.mean(row_loss[:B, 0])


def _reference_loss(x_lm, candidates_lm_z):
    """Plain-JAX reference mirroring the PyTorch module (full N x N logits)."""
    B, D = x_lm.shape
    _, C, _ = candidates_lm_z.shape
    N = B * C
    eps = 1e-12
    x = jnp.broadcast_to(x_lm[:, None, :], (B, C, D)).reshape(N, D).astype(jnp.float32)
    c = candidates_lm_z.reshape(N, D).astype(jnp.float32)
    xn = x / jnp.maximum(jnp.linalg.norm(x, axis=-1, keepdims=True), eps)
    cn = c / jnp.maximum(jnp.linalg.norm(c, axis=-1, keepdims=True), eps)
    logits = xn @ cn.T
    lse = jax.nn.logsumexp(logits, axis=-1)
    return jnp.mean(lse - logits[:, 1])


if __name__ == "__main__":
    key = jax.random.PRNGKey(0)
    k1, k2 = jax.random.split(key)

    # Small demo shapes consistent with the module: B=2 queries, C=4 candidates,
    # hidden D=32 (N = B*C = 8).
    B, C, D = 2, 4, 32
    x_lm = jax.random.normal(k1, (B, D), dtype=jnp.float32)
    candidates_lm_z = jax.random.normal(k2, (B, C, D), dtype=jnp.float32)

    loss = distillation_loss(x_lm, candidates_lm_z)
    jax.block_until_ready(loss)
    ref = _reference_loss(x_lm, candidates_lm_z)
    assert jnp.allclose(loss, ref, rtol=1e-4, atol=1e-4), (loss, ref)

    # Also exercise the tiled / masked-padding reduction path at small shapes
    # (N = 15 with a forced key tile of 8 -> 2 key tiles, last one padded).
    k3, k4 = jax.random.split(k2)
    B2, C2, D2 = 3, 5, 32
    x2 = jax.random.normal(k3, (B2, D2), dtype=jnp.float32)
    c2 = jax.random.normal(k4, (B2, C2, D2), dtype=jnp.float32)
    loss2 = distillation_loss(x2, c2, max_tk=8)
    jax.block_until_ready(loss2)
    ref2 = _reference_loss(x2, c2)
    assert jnp.allclose(loss2, ref2, rtol=1e-4, atol=1e-4), (loss2, ref2)

    print("KERNEL_OK")
</pallas_src>

<mosaic_0001>
module attributes {stable_mosaic.version = 11 : i64} {
  func.func @_distill_loss_kernel(%arg0: i32, %arg1: i32, %arg2: memref<2x128xf32, #tpu.memory_space<vmem>>, %arg3: memref<8x128xf32, #tpu.memory_space<vmem>>, %arg4: memref<2x1xf32, #tpu.memory_space<vmem>>, %arg5: memref<2x128xf32, #tpu.memory_space<vmem>>, %arg6: memref<2x1xf32, #tpu.memory_space<vmem>>, %arg7: memref<2x1xf32, #tpu.memory_space<vmem>>, %arg8: memref<2x1xf32, #tpu.memory_space<vmem>>) attributes {dimension_semantics = [#tpu.dimension_semantics<parallel>, #tpu.dimension_semantics<arbitrary>], iteration_bounds = array<i64: 1, 1>, scalar_prefetch = 0 : i64, scratch_operands = 4 : i64, tpu.core_type = #tpu.core_type<tc>, window_params = [{transform_indices = @transform_0, window_bounds = array<i64: 2, 128>}, {transform_indices = @transform_1, window_bounds = array<i64: 8, 128>}, {transform_indices = @transform_2, window_bounds = array<i64: 2, 1>}]} {
    %c0_i32 = arith.constant 0 : i32
    %0 = arith.cmpi eq, %arg1, %c0_i32 : i32
    %1 = arith.extui %0 : i1 to i32
    %cst = arith.constant 9.99999996E-13 : f32
    %c0_i32_0 = arith.constant 0 : i32
    %2 = arith.cmpi ne, %1, %c0_i32_0 : i32
    scf.if %2 {
      %c0_22 = arith.constant 0 : index
      %c0_23 = arith.constant 0 : index
      %37 = vector.load %arg2[%c0_22, %c0_23] : memref<2x128xf32, #tpu.memory_space<vmem>>, vector<2x128xf32>
      %38 = arith.mulf %37, %37 : vector<2x128xf32>
      %cst_24 = arith.constant dense<0.000000e+00> : vector<2xf32>
      %39 = vector.multi_reduction <add>, %38, %cst_24 [1] : vector<2x128xf32> to vector<2xf32>
      %40 = vector.shape_cast %39 : vector<2xf32> to vector<2x1xf32>
      %41 = arith.mulf %cst, %cst : f32
      %42 = vector.broadcast %41 : f32 to vector<2x1xf32>
      %43 = arith.maximumf %40, %42 : vector<2x1xf32>
      %44 = math.rsqrt %43 : vector<2x1xf32>
      %45 = vector.broadcast %44 : vector<2x1xf32> to vector<2x128xf32>
      %46 = arith.mulf %37, %45 : vector<2x128xf32>
      %c0_25 = arith.constant 0 : index
      %c0_26 = arith.constant 0 : index
      %47 = vector.load %arg5[%c0_25, %c0_26] : memref<2x128xf32, #tpu.memory_space<vmem>>, vector<2x128xf32>
      tpu.vector_store %arg5[%c0_25, %c0_26], %46 {strides = array<i32>} : memref<2x128xf32, #tpu.memory_space<vmem>>, vector<2x128xf32>,
      %cst_27 = arith.constant 0xFF800000 : f32
      %48 = vector.broadcast %cst_27 : f32 to vector<2x1xf32>
      %c0_28 = arith.constant 0 : index
      %c0_29 = arith.constant 0 : index
      %49 = vector.load %arg6[%c0_28, %c0_29] : memref<2x1xf32, #tpu.memory_space<vmem>>, vector<2x1xf32>
      tpu.vector_store %arg6[%c0_28, %c0_29], %48 {strides = array<i32>} : memref<2x1xf32, #tpu.memory_space<vmem>>, vector<2x1xf32>,
      %cst_30 = arith.constant 0.000000e+00 : f32
      %50 = vector.broadcast %cst_30 : f32 to vector<2x1xf32>
      %c0_31 = arith.constant 0 : index
      %c0_32 = arith.constant 0 : index
      %51 = vector.load %arg7[%c0_31, %c0_32] : memref<2x1xf32, #tpu.memory_space<vmem>>, vector<2x1xf32>
      tpu.vector_store %arg7[%c0_31, %c0_32], %50 {strides = array<i32>} : memref<2x1xf32, #tpu.memory_space<vmem>>, vector<2x1xf32>,
      %cst_33 = arith.constant 0.000000e+00 : f32
      %52 = vector.broadcast %cst_33 : f32 to vector<2x1xf32>
      %c0_34 = arith.constant 0 : index
      %c0_35 = arith.constant 0 : index
      %53 = vector.load %arg8[%c0_34, %c0_35] : memref<2x1xf32, #tpu.memory_space<vmem>>, vector<2x1xf32>
      tpu.vector_store %arg8[%c0_34, %c0_35], %52 {strides = array<i32>} : memref<2x1xf32, #tpu.memory_space<vmem>>, vector<2x1xf32>,
    } else {
    }
    %c0 = arith.constant 0 : index
    %c0_1 = arith.constant 0 : index
    %3 = vector.load %arg3[%c0, %c0_1] : memref<8x128xf32, #tpu.memory_space<vmem>>, vector<8x128xf32>
    %4 = arith.mulf %3, %3 : vector<8x128xf32>
    %cst_2 = arith.constant dense<0.000000e+00> : vector<8xf32>
    %5 = vector.multi_reduction <add>, %4, %cst_2 [1] : vector<8x128xf32> to vector<8xf32>
    %6 = vector.shape_cast %5 : vector<8xf32> to vector<8x1xf32>
    %cst_3 = arith.constant 9.99999996E-13 : f32
    %cst_4 = arith.constant 9.99999996E-13 : f32
    %7 = arith.mulf %cst_3, %cst_4 : f32
    %8 = vector.broadcast %7 : f32 to vector<8x1xf32>
    %9 = arith.maximumf %6, %8 : vector<8x1xf32>
    %10 = math.rsqrt %9 : vector<8x1xf32>
    %11 = vector.broadcast %10 : vector<8x1xf32> to vector<8x128xf32>
    %12 = arith.mulf %3, %11 : vector<8x128xf32>
    %c0_5 = arith.constant 0 : index
    %c0_6 = arith.constant 0 : index
    %13 = vector.load %arg5[%c0_5, %c0_6] : memref<2x128xf32, #tpu.memory_space<vmem>>, vector<2x128xf32>
    %cst_7 = arith.constant dense<0.000000e+00> : vector<2x8xf32>
    %14 = tpu.matmul %13, %12, %cst_7 {dimension_numbers = #tpu.dot_dimension_numbers<[1], [1], [0], [0], [0, 0, 1, 0], [], []>} : vector<2x128xf32>, vector<8x128xf32>, vector<2x8xf32> -> vector<2x8xf32>
    %c0_i32_8 = arith.constant 0 : i32
    %15 = arith.cmpi eq, %arg1, %c0_i32_8 : i32
    %16 = arith.extui %15 : i1 to i32
    %c0_i32_9 = arith.constant 0 : i32
    %17 = arith.cmpi ne, %16, %c0_i32_9 : i32
    scf.if %17 {
      %37 = vector.extract_strided_slice %14 {offsets = [0, 1], sizes = [2, 1], strides = [1, 1]} : vector<2x8xf32> to vector<2x1xf32>
      %c0_22 = arith.constant 0 : index
      %c0_23 = arith.constant 0 : index
      %38 = vector.load %arg8[%c0_22, %c0_23] : memref<2x1xf32, #tpu.memory_space<vmem>>, vector<2x1xf32>
      tpu.vector_store %arg8[%c0_22, %c0_23], %37 {strides = array<i32>} : memref<2x1xf32, #tpu.memory_space<vmem>>, vector<2x1xf32>,
    } else {
    }
    %c0_10 = arith.constant 0 : index
    %c0_11 = arith.constant 0 : index
    %18 = vector.load %arg6[%c0_10, %c0_11] : memref<2x1xf32, #tpu.memory_space<vmem>>, vector<2x1xf32>
    %cst_12 = arith.constant dense<0xFF800000> : vector<2xf32>
    %19 = vector.multi_reduction <maximumf>, %14, %cst_12 [1] : vector<2x8xf32> to vector<2xf32>
    %20 = vector.shape_cast %19 : vector<2xf32> to vector<2x1xf32>
    %21 = arith.maximumf %18, %20 : vector<2x1xf32>
    %22 = arith.subf %18, %21 : vector<2x1xf32>
    %23 = math.exp %22 : vector<2x1xf32>
    %c0_13 = arith.constant 0 : index
    %c0_14 = arith.constant 0 : index
    %24 = vector.load %arg7[%c0_13, %c0_14] : memref<2x1xf32, #tpu.memory_space<vmem>>, vector<2x1xf32>
    %25 = arith.mulf %23, %24 : vector<2x1xf32>
    %26 = vector.broadcast %21 : vector<2x1xf32> to vector<2x8xf32>
    %27 = arith.subf %14, %26 : vector<2x8xf32>
    %28 = math.exp %27 : vector<2x8xf32>
    %cst_15 = arith.constant dense<0.000000e+00> : vector<2xf32>
    %29 = vector.multi_reduction <add>, %28, %cst_15 [1] : vector<2x8xf32> to vector<2xf32>
    %30 = vector.shape_cast %29 : vector<2xf32> to vector<2x1xf32>
    %31 = arith.addf %25, %30 : vector<2x1xf32>
    %c0_16 = arith.constant 0 : index
    %c0_17 = arith.constant 0 : index
    %32 = vector.load %arg7[%c0_16, %c0_17] : memref<2x1xf32, #tpu.memory_space<vmem>>, vector<2x1xf32>
    tpu.vector_store %arg7[%c0_16, %c0_17], %31 {strides = array<i32>} : memref<2x1xf32, #tpu.memory_space<vmem>>, vector<2x1xf32>,
    %c0_18 = arith.constant 0 : index
    %c0_19 = arith.constant 0 : index
    %33 = vector.load %arg6[%c0_18, %c0_19] : memref<2x1xf32, #tpu.memory_space<vmem>>, vector<2x1xf32>
    tpu.vector_store %arg6[%c0_18, %c0_19], %21 {strides = array<i32>} : memref<2x1xf32, #tpu.memory_space<vmem>>, vector<2x1xf32>,
    %c0_i32_20 = arith.constant 0 : i32
    %34 = arith.cmpi eq, %arg1, %c0_i32_20 : i32
    %35 = arith.extui %34 : i1 to i32
    %c0_i32_21 = arith.constant 0 : i32
    %36 = arith.cmpi ne, %35, %c0_i32_21 : i32
    scf.if %36 {
      %c0_22 = arith.constant 0 : index
      %c0_23 = arith.constant 0 : index
      %37 = vector.load %arg6[%c0_22, %c0_23] : memref<2x1xf32, #tpu.memory_space<vmem>>, vector<2x1xf32>
      %c0_24 = arith.constant 0 : index
      %c0_25 = arith.constant 0 : index
      %38 = vector.load %arg7[%c0_24, %c0_25] : memref<2x1xf32, #tpu.memory_space<vmem>>, vector<2x1xf32>
      %39 = math.log %38 : vector<2x1xf32>
      %40 = arith.addf %37, %39 : vector<2x1xf32>
      %c0_26 = arith.constant 0 : index
      %c0_27 = arith.constant 0 : index
      %41 = vector.load %arg8[%c0_26, %c0_27] : memref<2x1xf32, #tpu.memory_space<vmem>>, vector<2x1xf32>
      %42 = arith.subf %40, %41 : vector<2x1xf32>
      %c0_28 = arith.constant 0 : index
      %c0_29 = arith.constant 0 : index
      %43 = vector.load %arg4[%c0_28, %c0_29] : memref<2x1xf32, #tpu.memory_space<vmem>>, vector<2x1xf32>
      tpu.vector_store %arg4[%c0_28, %c0_29], %42 {strides = array<i32>} : memref<2x1xf32, #tpu.memory_space<vmem>>, vector<2x1xf32>,
    } else {
    }
    return
  }
  func.func @transform_0(%arg0: i32, %arg1: i32) -> (i32, i32) {
    %c0_i32 = arith.constant 0 : i32
    %c0_i32_0 = arith.constant 0 : i32
    return %arg0, %c0_i32 : i32, i32
  }
  func.func @transform_1(%arg0: i32, %arg1: i32) -> (i32, i32) {
    %c0_i32 = arith.constant 0 : i32
    %c0_i32_0 = arith.constant 0 : i32
    return %arg1, %c0_i32 : i32, i32
  }
  func.func @transform_2(%arg0: i32, %arg1: i32) -> (i32, i32) {
    %c0_i32 = arith.constant 0 : i32
    %c0_i32_0 = arith.constant 0 : i32
    return %arg0, %c0_i32 : i32, i32
  }
}

</mosaic_0001>

<llo_original>
// kernel: tpu_custom_call.1
$region0: #{tpu_custom_call.1}
  #allocation0 [shape = 'u32[]', space=smem, size = 0x4, offset = 0x4, fixed_abs, tag = 'smem constant byte address 0x4 - core index']
  #allocation1 [shape = 'u32[144,128]{1,0:T(1,128)}', space=vmem, size = 0x12000, scoped, tag = 'internal scratch']
  #allocation2 [shape = 'f32[2,128]{1,0:T(2,128)}', space=vmem, size = 0x400, scoped, tag = 'scratch operand']
  #allocation3 [shape = 'f32[2,1]{1,0:T(2,128)}', space=vmem, size = 0x400, scoped, tag = 'scratch operand']
  #allocation4 [shape = 'f32[2,1]{1,0:T(2,128)}', space=vmem, size = 0x400, scoped, tag = 'scratch operand']
  #allocation5 [shape = 'f32[2,1]{1,0:T(2,128)}', space=vmem, size = 0x400, scoped, tag = 'scratch operand']
  %s0 = inlined_call_operand.hbm [shape: f32[2,128], index: 0, kind: input, shape index: {}]
  %s1 = inlined_call_operand.hbm [shape: f32[8,128], index: 1, kind: input, shape index: {}]
  %s2 = inlined_call_operand.vmem [shape: f32[2,1], index: 2, kind: output, shape index: {}]
  %s3 = sld [smem:[#allocation0]]
  $region38: #{tpu_custom_call.1} parent=0
    _
  %s5 = ssub.s32 1, %s3
  %s6 = scalar_select 0, %s5, %s3
  $region1: #{tpu_custom_call.1} parent=0
    #allocation6 [shape = 'u8[1024]{0}', space=vmem, size = 0x400, scoped, tag = 'input window, operand 0, single buffered']
    #allocation7 [shape = 's32[1]{0}', space=sflag, size = 0x4, scoped, tag = 'scoped memory for tpu_custom_call.1']
    #allocation8 [shape = 'u8[4096]{0}', space=vmem, size = 0x1000, scoped, tag = 'input window, operand 1, single buffered']
    #allocation9 [shape = 's32[1]{0}', space=sflag, size = 0x4, scoped, tag = 'scoped memory for tpu_custom_call.1']
    %7 = vsyncpa [#allocation7], 0
    %8 = vsyncpa [#allocation9], 0
    // Predicated region
    $region2: #{tpu_custom_call.1} parent=1 // pred_check
      _
    $region3: #{tpu_custom_call.1} parent=1 // pred_check_branch
      %10 = sbr.rel (0) target = $region5
    $region4: #{tpu_custom_call.1} parent=1 // pred_region
      %s12 = ssub.s32 32, 32
      %13 = vsyncadd [#allocation7], %s12
      %s15 = sshll.u32 [#allocation6], 4
      %s16 = int_to_ptr.vmem [resolvable:$true] %s15
      %18 = dma.hbm_to_vmem [thread:$0]  %s0, 32, %s16, [#allocation7]
    $region5: #{tpu_custom_call.1} parent=1 // pred_fallthru
      _
    // Predicated region
    $region6: #{tpu_custom_call.1} parent=1 // pred_check
      _
    $region7: #{tpu_custom_call.1} parent=1 // pred_check_branch
      %20 = sbr.rel (0) target = $region9
    $region8: #{tpu_custom_call.1} parent=1 // pred_region
      %s22 = ssub.s32 128, 128
      %23 = vsyncadd [#allocation9], %s22
      %s25 = sshll.u32 [#allocation8], 4
      %s26 = int_to_ptr.vmem [resolvable:$true] %s25
      %28 = dma.hbm_to_vmem [thread:$0]  %s1, 128, %s26, [#allocation9]
    $region9: #{tpu_custom_call.1} parent=1 // pred_fallthru
      _
    // Predicated region
    $region10: #{tpu_custom_call.1} parent=1 // pred_check
      _
    $region11: #{tpu_custom_call.1} parent=1 // pred_check_branch
      %30 = sbr.rel (0) target = $region13
    $region12: #{tpu_custom_call.1} parent=1 // pred_region
      %31 = dma.done [#allocation7], 32
    $region13: #{tpu_custom_call.1} parent=1 // pred_fallthru
      _
    // Predicated region
    $region14: #{tpu_custom_call.1} parent=1 // pred_check
      _
    $region15: #{tpu_custom_call.1} parent=1 // pred_check_branch
      %33 = sbr.rel (0) target = $region17
    $region16: #{tpu_custom_call.1} parent=1 // pred_region
      %34 = dma.done [#allocation9], 128
    $region17: #{tpu_custom_call.1} parent=1 // pred_fallthru
      _
    %p35 = scmp.eq.s32.totalorder 0, 0
    // Predicated region
    $region18: #{tpu_custom_call.1} parent=1 // pred_check
      %p36 = pneg %p35
    $region19: #{tpu_custom_call.1} parent=1 // pred_check_branch
      %38 = sbr.rel (%p36) target = $region21
    $region20: #{tpu_custom_call.1} parent=1 // pred_region
      %v39 = vld [vmem:[#allocation6] sm:$0x3]
      %v40 = vmul.f32 %v39, %v39
      %vm41 = vcmask 1041408
      %v42 = vsel %vm41, %v40, 0.0
      %43 = vadd.xlane.f32.xlu0 %v42
      %v44 = vpop.xlane.xlu0 %43
      %v45 = vmax.f32 %v44, 1e-24
      %v46 = vrsqrt.pop %v45
      %v47 = vmul.f32 %v39, %v46
      %48 = vst [vmem:[#allocation2] sm:$0x3] %v47
      %vm49 = vcmask 1024
      %50 = vst.msk [vmem:[#allocation3] sm:$0x3] %vm49, -inf
      %51 = vst.msk [vmem:[#allocation4] sm:$0x3] %vm49, 0.0
      %52 = vst.msk [vmem:[#allocation5] sm:$0x3] %vm49, 0.0
    $region21: #{tpu_custom_call.1} parent=1 // pred_fallthru
      _
    %v53 = vld [vmem:[#allocation8] sm:$0xff]
    %v54 = vmul.f32 %v53, %v53
    %55 = vadd.xlane.f32.xlu0 %v54
    %v56 = vpop.xlane.xlu0 %55
    %v57 = vmax.f32 %v56, 1e-24
    %v58 = vrsqrt.pop %v57
    %v59 = vmul.f32 %v53, %v58
    %v60 = vld [vmem:[#allocation2] sm:$0x3]
    %61 = vmatprep.subr.mxu0 0.0
    %62 = vmatpush1.xpose.msra.mxu0 0.0
    %63 = vmatprep.subr.mxu0 0.0
    %64 = vmatpush1.xpose.msra.mxu0 0.0
    %65 = vmatprep.subr.mxu0 0.0
    %66 = vmatpush1.xpose.msra.mxu0 0.0
    %67 = vmatprep.subr.mxu0 0.0
    %68 = vmatpush1.xpose.msra.mxu0 0.0
    %69 = vmatprep.subr.mxu0 0.0
    %70 = vmatpush1.xpose.msra.mxu0 0.0
    %71 = vmatprep.subr.mxu0 0.0
    %72 = vmatpush1.xpose.msra.mxu0 0.0
    %73 = vmatprep.subr.mxu0 0.0
    %74 = vmatpush1.xpose.msra.mxu0 0.0
    %75 = vmatprep.subr.mxu0 0.0
    %76 = vmatpush1.xpose.msra.mxu0 0.0
    %77 = vmatprep.subr.mxu0 0.0
    %78 = vmatpush1.xpose.msra.mxu0 0.0
    %79 = vmatprep.subr.mxu0 0.0
    %80 = vmatpush1.xpose.msra.mxu0 0.0
    %81 = vmatprep.subr.mxu0 0.0
    %82 = vmatpush1.xpose.msra.mxu0 0.0
    %83 = vmatprep.subr.mxu0 0.0
    %84 = vmatpush1.xpose.msra.mxu0 0.0
    %85 = vmatprep.subr.mxu0 0.0
    %86 = vmatpush1.xpose.msra.mxu0 0.0
    %87 = vmatprep.subr.mxu0 0.0
    %88 = vmatpush1.xpose.msra.mxu0 0.0
    %89 = vmatprep.subr.mxu0 0.0
    %90 = vmatpush1.xpose.msra.mxu0 0.0
    %91 = vmatprep.subr.mxu0 0.0
    %92 = vmatpush1.xpose.msra.mxu0 %v59
    %93 = vmatprep.subr.mxu0 0.0
    %94 = vmatpush2.xpose.msra.mxu0 0.0
    %95 = vmatprep.subr.mxu0 0.0
    %96 = vmatpush2.xpose.msra.mxu0 0.0
    %97 = vmatprep.subr.mxu0 0.0
    %98 = vmatpush2.xpose.msra.mxu0 0.0
    %99 = vmatprep.subr.mxu0 0.0
    %100 = vmatpush2.xpose.msra.mxu0 0.0
    %101 = vmatprep.subr.mxu0 0.0
    %102 = vmatpush2.xpose.msra.mxu0 0.0
    %103 = vmatprep.subr.mxu0 0.0
    %104 = vmatpush2.xpose.msra.mxu0 0.0
    %105 = vmatprep.subr.mxu0 0.0
    %106 = vmatpush2.xpose.msra.mxu0 0.0
    %107 = vmatprep.subr.mxu0 0.0
    %108 = vmatpush2.xpose.msra.mxu0 0.0
    %109 = vmatprep.subr.mxu0 0.0
    %110 = vmatpush2.xpose.msra.mxu0 0.0
    %111 = vmatprep.subr.mxu0 0.0
    %112 = vmatpush2.xpose.msra.mxu0 0.0
    %113 = vmatprep.subr.mxu0 0.0
    %114 = vmatpush2.xpose.msra.mxu0 0.0
    %115 = vmatprep.subr.mxu0 0.0
    %116 = vmatpush2.xpose.msra.mxu0 0.0
    %117 = vmatprep.subr.mxu0 0.0
    %118 = vmatpush2.xpose.msra.mxu0 0.0
    %119 = vmatprep.subr.mxu0 0.0
    %120 = vmatpush2.xpose.msra.mxu0 0.0
    %121 = vmatprep.subr.mxu0 0.0
    %122 = vmatpush2.xpose.msra.mxu0 0.0
    %123 = vmatprep.subr.mxu0 0.0
    %124 = vmatpush2.xpose.msra.mxu0 0.0
    %125 = vmatprep.mubr.f32.mxu0 0.0
    %126 = vmatmul.mubr.f32.gmra.mxu0 %v60
    %v127 = vpop.f32.mrf.mxu0
    %v128 = vadd.f32 0.0, %v127
    %v129 = vpop.f32.mrf.mxu0
    %130 = vdwg.mxu0
    // Predicated region
    $region22: #{tpu_custom_call.1} parent=1 // pred_check
      %p131 = pneg %p35
    $region23: #{tpu_custom_call.1} parent=1 // pred_check_branch
      %133 = sbr.rel (%p131) target = $region25
    $region24: #{tpu_custom_call.1} parent=1 // pred_region
      %135 = vrot.lane.b32.xlu0 %v128, 127
      %v136 = vpop.permute.xlu0 %135
      %vm138 = vcmask 1024
      %139 = vst.msk [vmem:[#allocation5] sm:$0x3] %vm138, %v136
    $region25: #{tpu_custom_call.1} parent=1 // pred_fallthru
      _
    %v140 = vld [vmem:[#allocation3] sm:$0x3]
    %vm141 = vcmask 58368
    %v142 = vsel %vm141, %v128, -inf
    %143 = vmax.xlane.f32.xlu0 %v142
    %v144 = vpop.xlane.xlu0 %143
    %v145 = vmax.f32 %v140, %v144
    %v146 = vsub.f32 %v140, %v145
    %v147 = vmul.f32 %v146, 1.442695
    %v148 = vpow.pop %v147
    %v149 = vld [vmem:[#allocation4] sm:$0x3]
    %v150 = vmul.f32 %v148, %v149
    %152 = vset.pattern.permute.xlu0 0
    %153 = vperm.xlu0 %152, %v145
    %v154 = vpop.permute.xlu0 %153
    %v156 = vsub.f32 %v128, %v154
    %v157 = vmul.f32 %v156, 1.442695
    %v158 = vpow.pop %v157
    %v159 = vsel %vm141, %v158, 0.0
    %160 = vadd.xlane.f32.xlu0 %v159
    %v161 = vpop.xlane.xlu0 %160
    %v162 = vadd.f32 %v150, %v161
    %vm163 = vcmask 1024
    %164 = vst.msk [vmem:[#allocation4] sm:$0x3] %vm163, %v162
    %165 = vst.msk [vmem:[#allocation3] sm:$0x3] %vm163, %v145
    // Predicated region
    $region26: #{tpu_custom_call.1} parent=1 // pred_check
      %p166 = pneg %p35
    $region27: #{tpu_custom_call.1} parent=1 // pred_check_branch
      %168 = sbr.rel (%p166) target = $region29
    $region28: #{tpu_custom_call.1} parent=1 // pred_region
      %v169 = vld [vmem:[#allocation3] sm:$0x3]
      %v170 = vld [vmem:[#allocation4] sm:$0x3]
      %v171 = vlog2.pop %v170
      %v172 = vmul.f32 %v171, 0.6931472
      %v173 = vadd.f32 %v169, %v172
      %v174 = vld [vmem:[#allocation5] sm:$0x3]
      %v175 = vsub.f32 %v173, %v174
      %176 = vst.msk [vmem:[%s2] sm:$0x3] %vm163, %v175
    $region29: #{tpu_custom_call.1} parent=1 // pred_fallthru
      _
    // Predicated region
    $region30: #{tpu_custom_call.1} parent=1 // pred_check
      _
    $region31: #{tpu_custom_call.1} parent=1 // pred_check_branch
      %178 = sbr.rel (0) target = $region33
    $region32: #{tpu_custom_call.1} parent=1 // pred_region
      _
    $region33: #{tpu_custom_call.1} parent=1 // pred_fallthru
      _
    // Predicated region
    $region34: #{tpu_custom_call.1} parent=1 // pred_check
      _
    $region35: #{tpu_custom_call.1} parent=1 // pred_check_branch
      %180 = sbr.rel (0) target = $region37
    $region36: #{tpu_custom_call.1} parent=1 // pred_region
      _
    $region37: #{tpu_custom_call.1} parent=1 // pred_fallthru
      _
    %181 = vsyncpa [#allocation7], 1
    %182 = vsyncpa [#allocation9], 1

</llo_original>
